<compile_context>
chip_gen: v7x
topology: tpu7x:2x2x1
jax: 0.10.0
libtpu: 0.0.40
codegen_flags: <defaults>
</compile_context>

<pallas_src>
import functools

import jax
import jax.numpy as jnp
from jax.experimental import pallas as pl
from jax.experimental.pallas import tpu as pltpu

_LANES = 128           # vreg lane width: last dim of the 2-D slab
_ROW_ALIGN = 32        # row multiple so (rows,128) uint8 tiles are aligned
_MAX_TILE_ROWS = 1024  # 1024x128 f32 = 512 KiB per stream per buffer


def _round_up(n, m):
    return ((n + m - 1) // m) * m


def _tiling(total_elems):
    """Rows of the padded (rows, 128) slab and the per-grid-step row tile."""
    rows = _round_up(max(1, -(-total_elems // _LANES)), _ROW_ALIGN)
    tile = rows
    if rows > _MAX_TILE_ROWS:
        for cand in (1024, 512, 256, 128, 64, _ROW_ALIGN):
            if rows % cand == 0:
                tile = cand
                break
    return rows, tile


def _to_slab(a, rows):
    flat = a.reshape(-1)
    pad = rows * _LANES - flat.shape[0]
    if pad:
        flat = jnp.pad(flat, (0, pad))
    return flat.reshape(rows, _LANES)


def _from_slab(slab, shape, total):
    return slab.reshape(-1)[:total].reshape(shape)


def _compiler_params():
    # Only attach Mosaic-specific params when actually lowering for TPU.
    if jax.default_backend() == "tpu":
        return pltpu.CompilerParams(dimension_semantics=("parallel",))
    return None


# ----------------------------------------------------------------------------
# Kernel 1: threshold pre-drawn random bits into a {0,1} mask AND apply dropout.
#   keep  <=>  (bits >> 8) < threshold24       (P(keep) = threshold24 / 2^24)
#   y = keep ? x / (1 - p) : 0
# ----------------------------------------------------------------------------
def _gen_and_apply_kernel(bits_ref, x_ref, mask_ref, y_ref, *, threshold24, inv_keep):
    r24 = (bits_ref[...] >> 8).astype(jnp.int32)          # top 24 random bits
    keep = r24 < jnp.int32(threshold24)
    mask_ref[...] = keep.astype(mask_ref.dtype)            # uint8 {0,1}
    xv = x_ref[...]
    scale = jnp.asarray(inv_keep, dtype=xv.dtype)
    y_ref[...] = jnp.where(keep, xv * scale, jnp.zeros_like(xv))


# ----------------------------------------------------------------------------
# Kernel 2: apply the persistent uint8 mask.
#   y = mask ? x / (1 - p) : 0
# ----------------------------------------------------------------------------
def _apply_kernel(x_ref, mask_ref, y_ref, *, inv_keep):
    xv = x_ref[...]
    scale = jnp.asarray(inv_keep, dtype=xv.dtype)
    keep = mask_ref[...] != 0
    y_ref[...] = jnp.where(keep, xv * scale, jnp.zeros_like(xv))


@functools.partial(jax.jit, static_argnames=("p",))
def _pallas_gen_and_apply(x, bits, p):
    keep_prob = 1.0 - p
    threshold24 = max(0, min(int(round(keep_prob * (1 << 24))), 1 << 24))
    inv_keep = (1.0 / keep_prob) if keep_prob > 0.0 else 0.0
    total = x.size
    rows, tile = _tiling(total)

    x2d = _to_slab(x, rows)
    b2d = _to_slab(bits, rows)

    kernel = functools.partial(
        _gen_and_apply_kernel, threshold24=threshold24, inv_keep=inv_keep)

    def spec():
        return pl.BlockSpec((tile, _LANES), lambda i: (i, 0))

    mask2d, y2d = pl.pallas_call(
        kernel,
        out_shape=(
            jax.ShapeDtypeStruct((rows, _LANES), jnp.uint8),  # persistent mask
            jax.ShapeDtypeStruct((rows, _LANES), x.dtype),    # dropout output
        ),
        grid=(rows // tile,),
        in_specs=[spec(), spec()],
        out_specs=(spec(), spec()),
        compiler_params=_compiler_params(),
    )(b2d, x2d)
    return _from_slab(mask2d, x.shape, total), _from_slab(y2d, x.shape, total)


@functools.partial(jax.jit, static_argnames=("p",))
def _pallas_apply(x, mask, p):
    keep_prob = 1.0 - p
    inv_keep = (1.0 / keep_prob) if keep_prob > 0.0 else 0.0
    total = x.size
    rows, tile = _tiling(total)

    x2d = _to_slab(x, rows)
    m2d = _to_slab(mask, rows)

    def spec():
        return pl.BlockSpec((tile, _LANES), lambda i: (i, 0))

    y2d = pl.pallas_call(
        functools.partial(_apply_kernel, inv_keep=inv_keep),
        out_shape=jax.ShapeDtypeStruct((rows, _LANES), x.dtype),
        grid=(rows // tile,),
        in_specs=[spec(), spec()],
        out_specs=spec(),
        compiler_params=_compiler_params(),
    )(x2d, m2d)
    return _from_slab(y2d, x.shape, total)


class PCDropout:
    """JAX/Pallas port of the PyTorch PCDropout module.

    The Bernoulli mask is sampled once (lazily, on first forward), persisted
    across calls as a uint8 tensor, and cleared via reset_mask(), matching the
    PyTorch semantics (mask is created even when training=False).
    """

    def __init__(self, p: float, seed: int = 1234):
        self.p = float(p)
        self.mask = None
        self._key = jax.random.PRNGKey(seed)

    def reset_mask(self) -> None:
        self.mask = None

    def __call__(self, x, training: bool):
        if self.mask is None:
            self._key, sub = jax.random.split(self._key)
            # Host-side random bits (pltpu.prng_* has no interpret/CPU lowering);
            # the thresholding + masking + scaling all run inside the kernel.
            bits = jax.random.bits(sub, x.shape, dtype=jnp.uint32)
            self.mask, y = _pallas_gen_and_apply(x, bits, self.p)
            return y if training else x
        return _pallas_apply(x, self.mask, self.p) if training else x


if __name__ == "__main__":
    key = jax.random.PRNGKey(0)
    N, C, H, W = 2, 4, 16, 16  # NCHW, matching the PyTorch convention
    x = jax.random.normal(key, (N, C, H, W), dtype=jnp.float32)

    p = 0.25
    layer = PCDropout(p, seed=1234)

    # Training forward: mask is generated + applied inside the Pallas kernel.
    y_train = jax.block_until_ready(layer(x, training=True))

    # Second training forward reuses the persistent mask (apply-only kernel).
    y_train2 = jax.block_until_ready(layer(x, training=True))

    # Eval forward: identity.
    y_eval = jax.block_until_ready(layer(x, training=False))

    mask = layer.mask
    expected = x * mask.astype(jnp.float32) / (1.0 - p)

    assert y_train.shape == x.shape and y_train.dtype == x.dtype
    assert jnp.allclose(y_train, expected, rtol=1e-5, atol=1e-5), "masked scale mismatch"
    assert jnp.allclose(y_train2, expected, rtol=1e-5, atol=1e-5), "persistent mask mismatch"
    assert jnp.allclose(y_eval, x), "eval mode must be identity"
    # mask must be exactly {0, 1}
    assert bool(jnp.all((mask == 0) | (mask == 1))), "mask not binary"
    assert mask.shape == x.shape

    # reset_mask resamples (shape still correct)
    layer.reset_mask()
    y3 = jax.block_until_ready(layer(x, training=True))
    assert y3.shape == x.shape

    print("KERNEL_OK")
</pallas_src>

<mosaic_0001>
module attributes {stable_mosaic.version = 11 : i64} {
  func.func @_gen_and_apply_kernel(%arg0: i32, %arg1: memref<32x128xi32, #tpu.memory_space<vmem>>, %arg2: memref<32x128xf32, #tpu.memory_space<vmem>>, %arg3: memref<32x128xi8, #tpu.memory_space<vmem>>, %arg4: memref<32x128xf32, #tpu.memory_space<vmem>>) attributes {dimension_semantics = [#tpu.dimension_semantics<arbitrary>], iteration_bounds = array<i64: 1>, scalar_prefetch = 0 : i64, scratch_operands = 0 : i64, tpu.core_type = #tpu.core_type<tc>, window_params = [{transform_indices = @transform_0, window_bounds = array<i64: 32, 128>}, {transform_indices = @transform_1, window_bounds = array<i64: 32, 128>}, {transform_indices = @transform_2, window_bounds = array<i64: 32, 128>}, {transform_indices = @transform_3, window_bounds = array<i64: 32, 128>}]} {
    %c0 = arith.constant 0 : index
    %c0_0 = arith.constant 0 : index
    %0 = vector.load %arg1[%c0, %c0_0] : memref<32x128xi32, #tpu.memory_space<vmem>>, vector<32x128xi32>
    %c8_i32 = arith.constant 8 : i32
    %1 = vector.broadcast %c8_i32 : i32 to vector<32x128xi32>
    %2 = arith.shrui %0, %1 : vector<32x128xi32>
    %c12582912_i32 = arith.constant 12582912 : i32
    %3 = vector.broadcast %c12582912_i32 : i32 to vector<32x128xi32>
    %4 = arith.cmpi slt, %2, %3 : vector<32x128xi32>
    %5 = arith.extui %4 : vector<32x128xi1> to vector<32x128xi8>
    %c0_1 = arith.constant 0 : index
    %c0_2 = arith.constant 0 : index
    %6 = vector.load %arg3[%c0_1, %c0_2] : memref<32x128xi8, #tpu.memory_space<vmem>>, vector<32x128xi8>
    tpu.vector_store %arg3[%c0_1, %c0_2], %5 {strides = array<i32>} : memref<32x128xi8, #tpu.memory_space<vmem>>, vector<32x128xi8>,
    %c0_3 = arith.constant 0 : index
    %c0_4 = arith.constant 0 : index
    %7 = vector.load %arg2[%c0_3, %c0_4] : memref<32x128xf32, #tpu.memory_space<vmem>>, vector<32x128xf32>
    %cst = arith.constant 1.33333337 : f32
    %8 = vector.broadcast %cst : f32 to vector<32x128xf32>
    %9 = arith.mulf %7, %8 : vector<32x128xf32>
    %cst_5 = arith.constant 0.000000e+00 : f32
    %10 = vector.broadcast %cst_5 : f32 to vector<32x128xf32>
    %11 = arith.select %4, %9, %10 : vector<32x128xi1>, vector<32x128xf32>
    %c0_6 = arith.constant 0 : index
    %c0_7 = arith.constant 0 : index
    %12 = vector.load %arg4[%c0_6, %c0_7] : memref<32x128xf32, #tpu.memory_space<vmem>>, vector<32x128xf32>
    tpu.vector_store %arg4[%c0_6, %c0_7], %11 {strides = array<i32>} : memref<32x128xf32, #tpu.memory_space<vmem>>, vector<32x128xf32>,
    return
  }
  func.func @transform_0(%arg0: i32) -> (i32, i32) {
    %c0_i32 = arith.constant 0 : i32
    %c0_i32_0 = arith.constant 0 : i32
    return %arg0, %c0_i32 : i32, i32
  }
  func.func @transform_1(%arg0: i32) -> (i32, i32) {
    %c0_i32 = arith.constant 0 : i32
    %c0_i32_0 = arith.constant 0 : i32
    return %arg0, %c0_i32 : i32, i32
  }
  func.func @transform_2(%arg0: i32) -> (i32, i32) {
    %c0_i32 = arith.constant 0 : i32
    %c0_i32_0 = arith.constant 0 : i32
    return %arg0, %c0_i32 : i32, i32
  }
  func.func @transform_3(%arg0: i32) -> (i32, i32) {
    %c0_i32 = arith.constant 0 : i32
    %c0_i32_0 = arith.constant 0 : i32
    return %arg0, %c0_i32 : i32, i32
  }
}

</mosaic_0001>

<llo_original>
// kernel: _pallas_gen_and_apply.1
$region0: #{_pallas_gen_and_apply.1}
  #allocation0 [shape = 'u32[]', space=smem, size = 0x4, offset = 0x4, fixed_abs, tag = 'smem constant byte address 0x4 - core index']
  #allocation1 [shape = 'u32[144,128]{1,0:T(1,128)}', space=vmem, size = 0x12000, scoped, tag = 'internal scratch']
  %s0 = inlined_call_operand.vmem [shape: u32[32,128], index: 0, kind: input, shape index: {}]
  %s1 = inlined_call_operand.vmem [shape: f32[32,128], index: 1, kind: input, shape index: {}]
  %s2 = inlined_call_operand.vmem [shape: u8[32,128], index: 2, kind: output, shape index: {0}]
  %s3 = inlined_call_operand.vmem [shape: f32[32,128], index: 3, kind: output, shape index: {1}]
  %4 = xla_tuple %s2, %s3
  %s5 = sld [smem:[#allocation0]]
  $region26: #{_pallas_gen_and_apply.1} parent=0
    _
  %s7 = ssub.s32 1, %s5
  %s8 = scalar_select 0, %s7, %s5
  // Predicated region
  $region2: #{_pallas_gen_and_apply.1} parent=0 // pred_check
    _
  $region3: #{_pallas_gen_and_apply.1} parent=0 // pred_check_branch
    %10 = sbr.rel (0) target = $region5
  $region4: #{_pallas_gen_and_apply.1} parent=0 // pred_region
    _
  $region5: #{_pallas_gen_and_apply.1} parent=0 // pred_fallthru
    _
  // Predicated region
  $region6: #{_pallas_gen_and_apply.1} parent=0 // pred_check
    _
  $region7: #{_pallas_gen_and_apply.1} parent=0 // pred_check_branch
    %12 = sbr.rel (0) target = $region9
  $region8: #{_pallas_gen_and_apply.1} parent=0 // pred_region
    _
  $region9: #{_pallas_gen_and_apply.1} parent=0 // pred_fallthru
    _
  %v15 = vld [vmem:[%s0] sm:$0xff]
  %v16 = vld [vmem:[%s0 + $0x8] sm:$0xff]
  %v17 = vld [vmem:[%s0 + $0x10] sm:$0xff]
  %v18 = vld [vmem:[%s0 + $0x18] sm:$0xff]
  %v19 = vshrl.u32 %v15, 8
  %v20 = vshrl.u32 %v16, 8
  %v21 = vshrl.u32 %v17, 8
  %v22 = vshrl.u32 %v18, 8
  %vm23 = vcmp.lt.s32.totalorder %v19, 12582912
  %vm24 = vcmp.lt.s32.totalorder %v20, 12582912
  %vm25 = vcmp.lt.s32.totalorder %v21, 12582912
  %vm26 = vcmp.lt.s32.totalorder %v22, 12582912
  %vm27 = vmpackc.low %vm24, %vm23
  %vm28 = vmpackc.low %vm26, %vm25
  %vm29 = vmpackc.even %vm28, %vm27
  %v30 = vsel %vm29, 16843009, 0
  %v31 = vunpack.c.0.s8 %v30
  %v32 = vunpack.c.1.s8 %v30
  %v33 = vunpack.c.2.s8 %v30
  %v34 = vunpack.c.3.s8 %v30
  %v35 = vpack.c.b16 %v31, %v31
  %v36 = vpack.c.b8 %v35, %v35
  %v37 = vpack.c.b16 %v32, %v32
  %v38 = vpack.c.b8 %v37, %v37
  %v39 = vpack.c.b16 %v33, %v33
  %v40 = vpack.c.b8 %v39, %v39
  %v41 = vpack.c.b16 %v34, %v34
  %v42 = vpack.c.b8 %v41, %v41
  %43 = vst [vmem:[%s2] sm:$0x3] %v36
  %44 = vst [vmem:[%s2 + $0x2] sm:$0x3] %v38
  %45 = vst [vmem:[%s2 + $0x4] sm:$0x3] %v40
  %46 = vst [vmem:[%s2 + $0x6] sm:$0x3] %v42
  %v47 = vld [vmem:[%s1] sm:$0xff]
  %v48 = vld [vmem:[%s1 + $0x8] sm:$0xff]
  %v49 = vld [vmem:[%s1 + $0x10] sm:$0xff]
  %v50 = vld [vmem:[%s1 + $0x18] sm:$0xff]
  %v51 = vmul.f32 %v47, 1.3333334
  %v52 = vmul.f32 %v48, 1.3333334
  %v53 = vmul.f32 %v49, 1.3333334
  %v54 = vmul.f32 %v50, 1.3333334
  %v55 = vsel %vm23, %v51, 0.0
  %v56 = vsel %vm24, %v52, 0.0
  %v57 = vsel %vm25, %v53, 0.0
  %v58 = vsel %vm26, %v54, 0.0
  %59 = vst [vmem:[%s3] sm:$0xff] %v55
  %60 = vst [vmem:[%s3 + $0x8] sm:$0xff] %v56
  %61 = vst [vmem:[%s3 + $0x10] sm:$0xff] %v57
  %62 = vst [vmem:[%s3 + $0x18] sm:$0xff] %v58
  // Predicated region
  $region10: #{_pallas_gen_and_apply.1} parent=0 // pred_check
    _
  $region11: #{_pallas_gen_and_apply.1} parent=0 // pred_check_branch
    %64 = sbr.rel (0) target = $region13
  $region12: #{_pallas_gen_and_apply.1} parent=0 // pred_region
    _
  $region13: #{_pallas_gen_and_apply.1} parent=0 // pred_fallthru
    _
  // Predicated region
  $region14: #{_pallas_gen_and_apply.1} parent=0 // pred_check
    _
  $region15: #{_pallas_gen_and_apply.1} parent=0 // pred_check_branch
    %66 = sbr.rel (0) target = $region17
  $region16: #{_pallas_gen_and_apply.1} parent=0 // pred_region
    _
  $region17: #{_pallas_gen_and_apply.1} parent=0 // pred_fallthru
    _
  // Predicated region
  $region18: #{_pallas_gen_and_apply.1} parent=0 // pred_check
    _
  $region19: #{_pallas_gen_and_apply.1} parent=0 // pred_check_branch
    %68 = sbr.rel (0) target = $region21
  $region20: #{_pallas_gen_and_apply.1} parent=0 // pred_region
    _
  $region21: #{_pallas_gen_and_apply.1} parent=0 // pred_fallthru
    _
  // Predicated region
  $region22: #{_pallas_gen_and_apply.1} parent=0 // pred_check
    _
  $region23: #{_pallas_gen_and_apply.1} parent=0 // pred_check_branch
    %70 = sbr.rel (0) target = $region25
  $region24: #{_pallas_gen_and_apply.1} parent=0 // pred_region
    _
  $region25: #{_pallas_gen_and_apply.1} parent=0 // pred_fallthru
    _

</llo_original>
